<compile_context>
chip_gen: v7x
topology: tpu7x:2x2x1
jax: 0.10.0
libtpu: 0.0.40
codegen_flags: <defaults>
</compile_context>

<pallas_src>
import functools

import jax
import jax.numpy as jnp
from jax.experimental import pallas as pl
from jax.experimental.pallas import tpu as pltpu

LN_EPS = 1e-5


def _round_up(a, b):
    return (a + b - 1) // b * b


def _chip_config():
    """Per-generation tiling knobs, keyed off VMEM capacity (v7x has 64 MiB)."""
    try:
        vmem = int(pltpu.get_tpu_info().vmem_capacity_bytes)
    except Exception:
        vmem = 64 * 1024 * 1024  # unknown -> use conservative (v7x-safe) settings
    if vmem > 96 * 1024 * 1024:
        # v5e / v6e: 128 MiB physical VMEM, 1 TensorCore.
        return dict(budget=48 << 20, limit=64 << 20, max_rows=8192, min_steps=2)
    # v7x-class: 64 MiB VMEM, 2 TensorCores -> >= 2 pipelined steps per core.
    return dict(budget=22 << 20, limit=32 << 20, max_rows=2048, min_steps=4)


def _mpt_kernel(xe_ref, xo_ref, we_ref, wo_ref, g_ref, b_ref, o_ref):
    # xe_ref / xo_ref: (tbh, W2p, 2C) -- even / odd image rows of tbh row-pair
    # groups.  W2p is a multiple of the sublane tile, so the flatten below is a
    # pure layout no-op (no sublane repack).
    tbh, w2p, c2 = xe_ref.shape
    rows = tbh * w2p
    xe = xe_ref[...].reshape(rows, c2)
    xo = xo_ref[...].reshape(rows, c2)

    # Linear(4C, 2C, bias=False) as two (2C, 2C) halves, f32 accumulate on MXU.
    y = jnp.dot(xe, we_ref[...], preferred_element_type=jnp.float32)
    y = y + jnp.dot(xo, wo_ref[...], preferred_element_type=jnp.float32)

    # LayerNorm(2C) in f32 (biased variance, matches PyTorch).
    mean = jnp.mean(y, axis=-1, keepdims=True)
    yc = y - mean
    var = jnp.mean(yc * yc, axis=-1, keepdims=True)
    yn = yc * jax.lax.rsqrt(var + LN_EPS)
    out = yn * g_ref[...] + b_ref[...]

    o_ref[...] = out.astype(o_ref.dtype).reshape(tbh, w2p, c2)


@functools.partial(jax.jit, static_argnames=("input_resolution", "dim"))
def mpt_forward(x, w_red, ln_gamma, ln_beta, *, input_resolution, dim):
    """x: (B, L, C) with L = H*W, C = dim.  Returns (B, H/2*W/2, 2*dim)."""
    H, W = input_resolution
    B, L, C = x.shape
    assert L == H * W, "input feature has wrong size"
    assert H % 2 == 0 and W % 2 == 0, f"x size ({H}*{W}) are not even."
    assert C == dim
    H2, W2 = H // 2, W // 2
    c2 = 2 * C
    n_bh = B * H2
    n_rows = n_bh * W2
    itemsize = jnp.dtype(x.dtype).itemsize

    # nn.Linear(4C, 2C, bias=False): y = [x0|x1|x2|x3] @ w_red.T.
    # An even image row holds [x0 | x2] contiguously and an odd row [x1 | x3],
    # so split/reorder the transposed weight into two (2C, 2C) halves.
    wt = w_red.T                                               # (4C, 2C)
    we = jnp.concatenate([wt[0:C], wt[2 * C:3 * C]], axis=0).astype(x.dtype)
    wo = jnp.concatenate([wt[C:2 * C], wt[3 * C:4 * C]], axis=0).astype(x.dtype)
    g = ln_gamma.reshape(1, c2).astype(jnp.float32)
    b = ln_beta.reshape(1, c2).astype(jnp.float32)

    # Free (row-major) view: (row-pair group, parity, W/2, 2C).
    xr = x.reshape(n_bh, 2, W2, c2)

    cfg = _chip_config()

    # Sublane-aligned padded W2 so the in-kernel flatten is a layout no-op.
    mult = 8 * max(1, 4 // itemsize)          # 8 for f32, 16 for bf16
    w2p = _round_up(W2, mult)

    # Row-pair tile: biggest that fits the VMEM budget / row cap, while keeping
    # at least cfg["min_steps"] grid programs (>= 2 per TensorCore on v7x).
    per_rp = w2p * c2 * (8 * itemsize + 8)    # dbuf'd xe/xo/out + f32 temps
    fixed = 4 * c2 * c2 * itemsize + 16 * c2 + (2 << 20)
    avail = max(cfg["budget"] - fixed, 1 << 20)
    tbh = max(1, avail // per_rp)
    tbh = min(tbh, max(1, cfg["max_rows"] // w2p))
    tbh = min(tbh, pl.cdiv(n_bh, cfg["min_steps"]))
    tbh = max(1, int(tbh))
    grid = (pl.cdiv(n_bh, tbh),)

    cost = pl.CostEstimate(
        flops=2 * n_rows * (2 * c2) * c2,
        transcendentals=n_rows,
        bytes_accessed=(3 * n_rows * c2 + 2 * c2 * c2) * itemsize + 2 * c2 * 4,
    )

    out3 = pl.pallas_call(
        _mpt_kernel,
        out_shape=jax.ShapeDtypeStruct((n_bh, W2, c2), x.dtype),
        grid=grid,
        in_specs=[
            # even image rows of each row-pair group (parity axis squeezed)
            pl.BlockSpec((tbh, None, w2p, c2), lambda i: (i, 0, 0, 0)),
            # odd image rows
            pl.BlockSpec((tbh, None, w2p, c2), lambda i: (i, 1, 0, 0)),
            pl.BlockSpec((c2, c2), lambda i: (0, 0)),   # W_e
            pl.BlockSpec((c2, c2), lambda i: (0, 0)),   # W_o
            pl.BlockSpec((1, c2), lambda i: (0, 0)),    # gamma
            pl.BlockSpec((1, c2), lambda i: (0, 0)),    # beta
        ],
        out_specs=pl.BlockSpec((tbh, w2p, c2), lambda i: (i, 0, 0)),
        compiler_params=pltpu.CompilerParams(
            dimension_semantics=("parallel",),
            vmem_limit_bytes=cfg["limit"],
        ),
        cost_estimate=cost,
    )(xr, xr, we, wo, g, b)

    return out3.reshape(B, H2 * W2, c2)


def _reference(x, w_red, ln_gamma, ln_beta, input_resolution):
    """Pure-JAX reference replicating the PyTorch forward exactly."""
    H, W = input_resolution
    B, L, C = x.shape
    xv = x.reshape(B, H, W, C)
    x0 = xv[:, 0::2, 0::2, :]
    x1 = xv[:, 1::2, 0::2, :]
    x2 = xv[:, 0::2, 1::2, :]
    x3 = xv[:, 1::2, 1::2, :]
    xc = jnp.concatenate([x0, x1, x2, x3], -1).reshape(B, -1, 4 * C)
    y = jnp.einsum("blk,nk->bln", xc, w_red,
                   precision=jax.lax.Precision.HIGHEST)
    mean = jnp.mean(y, axis=-1, keepdims=True)
    var = jnp.mean((y - mean) ** 2, axis=-1, keepdims=True)
    return (y - mean) / jnp.sqrt(var + LN_EPS) * ln_gamma + ln_beta


def _run_case(B, H, W, dim, key, name):
    L = H * W
    kx, kw, kg, kb = jax.random.split(key, 4)
    x = jax.random.normal(kx, (B, L, dim), dtype=jnp.float32)
    # nn.Linear(4*dim, 2*dim, bias=False): weight shape (2*dim, 4*dim)
    w_red = jax.random.normal(kw, (2 * dim, 4 * dim), dtype=jnp.float32) * 0.05
    ln_gamma = 1.0 + 0.1 * jax.random.normal(kg, (2 * dim,), dtype=jnp.float32)
    ln_beta = 0.1 * jax.random.normal(kb, (2 * dim,), dtype=jnp.float32)

    out = mpt_forward(x, w_red, ln_gamma, ln_beta,
                      input_resolution=(H, W), dim=dim)
    out = jax.block_until_ready(out)

    ref = _reference(x, w_red, ln_gamma, ln_beta, (H, W))
    assert out.shape == (B, (H // 2) * (W // 2), 2 * dim), name
    err = float(jnp.max(jnp.abs(out - ref)))
    assert err < 2e-2, f"{name}: max abs err {err}"


if __name__ == "__main__":
    key = jax.random.PRNGKey(0)
    k1, k2, k3 = jax.random.split(key, 3)
    # Aligned W/2 (W2 = 8), 2C = 128 (lane-dense output).
    _run_case(B=2, H=16, W=16, dim=64, key=k1, name="W2=8 aligned")
    # Swin-like odd W/2 (W2 = 7 -> padded block of 8), 2C = 128.
    _run_case(B=2, H=14, W=14, dim=64, key=k2, name="W2=7 padded")
    # Awkward leading extent (B*H/2 = 5 -> partial last grid block), 2C = 96.
    _run_case(B=1, H=10, W=16, dim=48, key=k3, name="partial grid block")
    print("KERNEL_OK")
</pallas_src>

<mosaic_0001>
module attributes {stable_mosaic.version = 11 : i64} {
  func.func @_mpt_kernel(%arg0: i32, %arg1: memref<4x1x8x128xf32, #tpu.memory_space<vmem>>, %arg2: memref<4x1x8x128xf32, #tpu.memory_space<vmem>>, %arg3: memref<128x128xf32, #tpu.memory_space<vmem>>, %arg4: memref<128x128xf32, #tpu.memory_space<vmem>>, %arg5: memref<1x128xf32, #tpu.memory_space<vmem>>, %arg6: memref<1x128xf32, #tpu.memory_space<vmem>>, %arg7: memref<4x8x128xf32, #tpu.memory_space<vmem>>) attributes {dimension_semantics = [#tpu.dimension_semantics<parallel>], iteration_bounds = array<i64: 4>, scalar_prefetch = 0 : i64, scratch_operands = 0 : i64, tpu.core_type = #tpu.core_type<tc>, window_params = [{transform_indices = @transform_0, window_bounds = array<i64: 4, 1, 8, 128>}, {transform_indices = @transform_1, window_bounds = array<i64: 4, 1, 8, 128>}, {pipeline_mode = #tpu.pipeline_mode<synchronous>, transform_indices = @transform_2, window_bounds = array<i64: 128, 128>}, {pipeline_mode = #tpu.pipeline_mode<synchronous>, transform_indices = @transform_3, window_bounds = array<i64: 128, 128>}, {pipeline_mode = #tpu.pipeline_mode<synchronous>, transform_indices = @transform_4, window_bounds = array<i64: 1, 128>}, {pipeline_mode = #tpu.pipeline_mode<synchronous>, transform_indices = @transform_5, window_bounds = array<i64: 1, 128>}, {transform_indices = @transform_6, window_bounds = array<i64: 4, 8, 128>}]} {
    %c0 = arith.constant 0 : index
    %c0_0 = arith.constant 0 : index
    %c0_1 = arith.constant 0 : index
    %c0_2 = arith.constant 0 : index
    %0 = vector.load %arg1[%c0, %c0_0, %c0_1, %c0_2] : memref<4x1x8x128xf32, #tpu.memory_space<vmem>>, vector<4x1x8x128xf32>
    %1 = vector.shape_cast %0 : vector<4x1x8x128xf32> to vector<4x8x128xf32>
    %2 = vector.shape_cast %1 : vector<4x8x128xf32> to vector<32x128xf32>
    %c0_3 = arith.constant 0 : index
    %c0_4 = arith.constant 0 : index
    %c0_5 = arith.constant 0 : index
    %c0_6 = arith.constant 0 : index
    %3 = vector.load %arg2[%c0_3, %c0_4, %c0_5, %c0_6] : memref<4x1x8x128xf32, #tpu.memory_space<vmem>>, vector<4x1x8x128xf32>
    %4 = vector.shape_cast %3 : vector<4x1x8x128xf32> to vector<4x8x128xf32>
    %5 = vector.shape_cast %4 : vector<4x8x128xf32> to vector<32x128xf32>
    %c0_7 = arith.constant 0 : index
    %c0_8 = arith.constant 0 : index
    %6 = vector.load %arg3[%c0_7, %c0_8] : memref<128x128xf32, #tpu.memory_space<vmem>>, vector<128x128xf32>
    %cst = arith.constant dense<0.000000e+00> : vector<32x128xf32>
    %7 = tpu.matmul %2, %6, %cst {dimension_numbers = #tpu.dot_dimension_numbers<[1], [0], [0], [1], [0, 0, 1, 1], [], []>} : vector<32x128xf32>, vector<128x128xf32>, vector<32x128xf32> -> vector<32x128xf32>
    %c0_9 = arith.constant 0 : index
    %c0_10 = arith.constant 0 : index
    %8 = vector.load %arg4[%c0_9, %c0_10] : memref<128x128xf32, #tpu.memory_space<vmem>>, vector<128x128xf32>
    %cst_11 = arith.constant dense<0.000000e+00> : vector<32x128xf32>
    %9 = tpu.matmul %5, %8, %cst_11 {dimension_numbers = #tpu.dot_dimension_numbers<[1], [0], [0], [1], [0, 0, 1, 1], [], []>} : vector<32x128xf32>, vector<128x128xf32>, vector<32x128xf32> -> vector<32x128xf32>
    %10 = arith.addf %7, %9 : vector<32x128xf32>
    %cst_12 = arith.constant dense<0.000000e+00> : vector<32xf32>
    %11 = vector.multi_reduction <add>, %10, %cst_12 [1] : vector<32x128xf32> to vector<32xf32>
    %12 = vector.shape_cast %11 : vector<32xf32> to vector<32x1xf32>
    %cst_13 = arith.constant 1.280000e+02 : f32
    %13 = vector.broadcast %cst_13 : f32 to vector<32x1xf32>
    %14 = arith.divf %12, %13 : vector<32x1xf32>
    %15 = vector.broadcast %14 : vector<32x1xf32> to vector<32x128xf32>
    %16 = arith.subf %10, %15 : vector<32x128xf32>
    %17 = arith.mulf %16, %16 : vector<32x128xf32>
    %cst_14 = arith.constant dense<0.000000e+00> : vector<32xf32>
    %18 = vector.multi_reduction <add>, %17, %cst_14 [1] : vector<32x128xf32> to vector<32xf32>
    %19 = vector.shape_cast %18 : vector<32xf32> to vector<32x1xf32>
    %cst_15 = arith.constant 1.280000e+02 : f32
    %20 = vector.broadcast %cst_15 : f32 to vector<32x1xf32>
    %21 = arith.divf %19, %20 : vector<32x1xf32>
    %cst_16 = arith.constant 9.99999974E-6 : f32
    %22 = vector.broadcast %cst_16 : f32 to vector<32x1xf32>
    %23 = arith.addf %21, %22 : vector<32x1xf32>
    %24 = math.rsqrt %23 : vector<32x1xf32>
    %25 = vector.broadcast %24 : vector<32x1xf32> to vector<32x128xf32>
    %26 = arith.mulf %16, %25 : vector<32x128xf32>
    %c0_17 = arith.constant 0 : index
    %c0_18 = arith.constant 0 : index
    %27 = vector.load %arg5[%c0_17, %c0_18] : memref<1x128xf32, #tpu.memory_space<vmem>>, vector<1x128xf32>
    %28 = vector.broadcast %27 : vector<1x128xf32> to vector<32x128xf32>
    %29 = arith.mulf %26, %28 : vector<32x128xf32>
    %c0_19 = arith.constant 0 : index
    %c0_20 = arith.constant 0 : index
    %30 = vector.load %arg6[%c0_19, %c0_20] : memref<1x128xf32, #tpu.memory_space<vmem>>, vector<1x128xf32>
    %31 = vector.broadcast %30 : vector<1x128xf32> to vector<32x128xf32>
    %32 = arith.addf %29, %31 : vector<32x128xf32>
    %33 = vector.shape_cast %32 : vector<32x128xf32> to vector<4x8x128xf32>
    %c0_21 = arith.constant 0 : index
    %c0_22 = arith.constant 0 : index
    %c0_23 = arith.constant 0 : index
    %34 = vector.load %arg7[%c0_21, %c0_22, %c0_23] : memref<4x8x128xf32, #tpu.memory_space<vmem>>, vector<4x8x128xf32>
    tpu.vector_store %arg7[%c0_21, %c0_22, %c0_23], %33 {strides = array<i32>} : memref<4x8x128xf32, #tpu.memory_space<vmem>>, vector<4x8x128xf32>,
    return
  }
  func.func @transform_0(%arg0: i32) -> (i32, i32, i32, i32) {
    %c0_i32 = arith.constant 0 : i32
    %c0_i32_0 = arith.constant 0 : i32
    %c0_i32_1 = arith.constant 0 : i32
    %c0_i32_2 = arith.constant 0 : i32
    return %arg0, %c0_i32, %c0_i32_0, %c0_i32_1 : i32, i32, i32, i32
  }
  func.func @transform_1(%arg0: i32) -> (i32, i32, i32, i32) {
    %c1_i32 = arith.constant 1 : i32
    %c0_i32 = arith.constant 0 : i32
    %c0_i32_0 = arith.constant 0 : i32
    %c0_i32_1 = arith.constant 0 : i32
    return %arg0, %c1_i32, %c0_i32, %c0_i32_0 : i32, i32, i32, i32
  }
  func.func @transform_2(%arg0: i32) -> (i32, i32) {
    %c0_i32 = arith.constant 0 : i32
    %c0_i32_0 = arith.constant 0 : i32
    %c0_i32_1 = arith.constant 0 : i32
    return %c0_i32, %c0_i32_0 : i32, i32
  }
  func.func @transform_3(%arg0: i32) -> (i32, i32) {
    %c0_i32 = arith.constant 0 : i32
    %c0_i32_0 = arith.constant 0 : i32
    %c0_i32_1 = arith.constant 0 : i32
    return %c0_i32, %c0_i32_0 : i32, i32
  }
  func.func @transform_4(%arg0: i32) -> (i32, i32) {
    %c0_i32 = arith.constant 0 : i32
    %c0_i32_0 = arith.constant 0 : i32
    %c0_i32_1 = arith.constant 0 : i32
    return %c0_i32, %c0_i32_0 : i32, i32
  }
  func.func @transform_5(%arg0: i32) -> (i32, i32) {
    %c0_i32 = arith.constant 0 : i32
    %c0_i32_0 = arith.constant 0 : i32
    %c0_i32_1 = arith.constant 0 : i32
    return %c0_i32, %c0_i32_0 : i32, i32
  }
  func.func @transform_6(%arg0: i32) -> (i32, i32, i32) {
    %c0_i32 = arith.constant 0 : i32
    %c0_i32_0 = arith.constant 0 : i32
    %c0_i32_1 = arith.constant 0 : i32
    return %arg0, %c0_i32, %c0_i32_0 : i32, i32, i32
  }
}

</mosaic_0001>

<llo_original>
// kernel: mpt_forward.1
$region0: #{mpt_forward.1}
  #allocation0 [shape = 'u32[]', space=smem, size = 0x4, offset = 0x4, fixed_abs, tag = 'smem constant byte address 0x4 - core index']
  #allocation1 [shape = 'u32[144,128]{1,0:T(1,128)}', space=vmem, size = 0x12000, scoped, tag = 'internal scratch']
  %s0 = inlined_call_operand.vmem [shape: f32[16,2,8,128], index: 0, kind: input, shape index: {}, may-alias: {0,1}]
  %s1 = inlined_call_operand.vmem [shape: f32[16,2,8,128], index: 1, kind: input, shape index: {}, may-alias: {0,1}]
  %s2 = inlined_call_operand.vmem [shape: f32[128,128], index: 2, kind: input, shape index: {}]
  %s3 = inlined_call_operand.vmem [shape: f32[128,128], index: 3, kind: input, shape index: {}]
  %s4 = inlined_call_operand.vmem [shape: f32[1,128], index: 4, kind: input, shape index: {}]
  %s5 = inlined_call_operand.vmem [shape: f32[1,128], index: 5, kind: input, shape index: {}]
  %s6 = inlined_call_operand.hbm [shape: f32[16,8,128], index: 6, kind: output, shape index: {}]
  %s7 = sld [smem:[#allocation0]]
  $region133: #{mpt_forward.1} parent=0
    _
  %s9 = ssub.s32 1, %s7
  %s10 = scalar_select 0, %s9, %s7
  $region1: #{mpt_forward.1} parent=0
    #allocation2 [shape = 'u8[32768]{0}', space=vmem, size = 0x8000, scoped, tag = 'input window, operand 0']
    #allocation3 [shape = 'u8[32768]{0}', space=vmem, size = 0x8000, scoped, tag = 'input window, operand 1']
    #allocation4 [shape = 'u8[32768]{0}', space=vmem, size = 0x8000, scoped, tag = 'output window, operand 0']
    #allocation5 [shape = 's32[2]{0}', space=sflag, size = 0x8, scoped, tag = 'scoped memory for mpt_forward.1']
    %11 = vsyncpa [#allocation5], 0
    %s12 = scalar_lea.sflag [#allocation5], 1
    %13 = vsyncpa %s12, 0
    loop: start=0, step=1, limit=6
    $region2: #{mpt_forward.1} parent=1 // loop_pre_header
      _
    $region3: #{mpt_forward.1} parent=1 // loop_header
      %s15 = sphi 0, %s19
      %p16 = scmp.ge.s32.totalorder %s15, 6
      %s25 = sphi 0, %s27
      %s28 = sphi 0, %s25
      %s29 = sphi 0, %s28
      %s45 = sphi 0, %s29
      %s51 = sphi 0, %s53
      %s54 = sphi 0, %s51
      %s55 = sphi 0, %s54
      %s71 = sphi 0, %s55
      %s75 = sphi 0, %s75
      %s77 = sphi 0, %s75
      %s78 = sphi 0, %s77
      %s92 = sphi 0, %s78
      %s96 = sphi 0, %s96
      %s98 = sphi 0, %s96
      %s99 = sphi 0, %s98
      %s113 = sphi 0, %s99
      %s117 = sphi 0, %s117
      %s119 = sphi 0, %s117
      %s120 = sphi 0, %s119
      %s134 = sphi 0, %s120
      %s138 = sphi 0, %s138
      %s140 = sphi 0, %s138
      %s141 = sphi 0, %s140
      %s155 = sphi 0, %s141
      %s161 = sphi 0, %s163
      %s164 = sphi 0, %s161
      %s165 = sphi 0, %s164
      %s181 = sphi 0, %s165
    $region4: #{mpt_forward.1} parent=1 // loop_header_branch
      %18 = sbr.rel (%p16) target = $region8
    $region5: #{mpt_forward.1} parent=1 // loop_body
      %s20 = ssub.s32 %s15, 1
      %s21 = ssub.s32 %s15, 2
      %s22 = sadd.s32 %s15, 1
      %s23 = ssub.s32 %s15, %s22
      %p24 = scmp.eq.s32.totalorder %s23, 0
      %s26 = sadd.s32 %s25, 1
      %s27 = scalar_select %p24, %s25, %s26
      %p30 = pneg %p24
      %p31 = scmp.eq.s32.totalorder %s15, 3
      %p32 = por %p30, %p31
      %p33 = scmp.ne.s32.totalorder %s25, %s28
      %p34 = scmp.eq.s32.totalorder %s15, 0
      %p35 = por %p33, %p34
      %p36 = scmp.ne.s32.totalorder %s25, %s28
      %p37 = scmp.eq.s32.totalorder %s20, 3
      %p38 = por %p36, %p37
      %p39 = scmp.ne.s32.totalorder %s28, %s29
      %p40 = scmp.eq.s32.totalorder %s20, 0
      %p41 = por %p39, %p40
      %p42 = scmp.ne.s32.totalorder %s28, %s29
      %p43 = scmp.eq.s32.totalorder %s21, 3
      %p44 = por %p42, %p43
      %p46 = scmp.ne.s32.totalorder %s29, %s45
      %p47 = scmp.eq.s32.totalorder %s21, 0
      %p48 = por %p46, %p47
      %s49 = ssub.s32 %s15, %s22
      %p50 = scmp.eq.s32.totalorder %s49, 0
      %s52 = sadd.s32 %s51, 1
      %s53 = scalar_select %p50, %s51, %s52
      %p56 = pneg %p50
      %p57 = scmp.eq.s32.totalorder %s15, 3
      %p58 = por %p56, %p57
      %p59 = scmp.ne.s32.totalorder %s51, %s54
      %p60 = scmp.eq.s32.totalorder %s15, 0
      %p61 = por %p59, %p60
      %p62 = scmp.ne.s32.totalorder %s51, %s54
      %p63 = scmp.eq.s32.totalorder %s20, 3
      %p64 = por %p62, %p63
      %p65 = scmp.ne.s32.totalorder %s54, %s55
      %p66 = scmp.eq.s32.totalorder %s20, 0
      %p67 = por %p65, %p66
      %p68 = scmp.ne.s32.totalorder %s54, %s55
      %p69 = scmp.eq.s32.totalorder %s21, 3
      %p70 = por %p68, %p69
      %p72 = scmp.ne.s32.totalorder %s55, %s71
      %p73 = scmp.eq.s32.totalorder %s21, 0
      %p74 = por %p72, %p73
      %s76 = sadd.s32 %s75, 1
      %p79 = scmp.eq.s32.totalorder %s15, 3
      %p80 = scmp.ne.s32.totalorder %s75, %s77
      %p81 = scmp.eq.s32.totalorder %s15, 0
      %p82 = por %p80, %p81
      %p83 = scmp.ne.s32.totalorder %s75, %s77
      %p84 = scmp.eq.s32.totalorder %s20, 3
      %p85 = por %p83, %p84
      %p86 = scmp.ne.s32.totalorder %s77, %s78
      %p87 = scmp.eq.s32.totalorder %s20, 0
      %p88 = por %p86, %p87
      %p89 = scmp.ne.s32.totalorder %s77, %s78
      %p90 = scmp.eq.s32.totalorder %s21, 3
      %p91 = por %p89, %p90
      %p93 = scmp.ne.s32.totalorder %s78, %s92
      %p94 = scmp.eq.s32.totalorder %s21, 0
      %p95 = por %p93, %p94
      %s97 = sadd.s32 %s96, 1
      %p100 = scmp.eq.s32.totalorder %s15, 3
      %p101 = scmp.ne.s32.totalorder %s96, %s98
      %p102 = scmp.eq.s32.totalorder %s15, 0
      %p103 = por %p101, %p102
      %p104 = scmp.ne.s32.totalorder %s96, %s98
      %p105 = scmp.eq.s32.totalorder %s20, 3
      %p106 = por %p104, %p105
      %p107 = scmp.ne.s32.totalorder %s98, %s99
      %p108 = scmp.eq.s32.totalorder %s20, 0
      %p109 = por %p107, %p108
      %p110 = scmp.ne.s32.totalorder %s98, %s99
      %p111 = scmp.eq.s32.totalorder %s21, 3
      %p112 = por %p110, %p111
      %p114 = scmp.ne.s32.totalorder %s99, %s113
      %p115 = scmp.eq.s32.totalorder %s21, 0
      %p116 = por %p114, %p115
      %s118 = sadd.s32 %s117, 1
      %p121 = scmp.eq.s32.totalorder %s15, 3
      %p122 = scmp.ne.s32.totalorder %s117, %s119
      %p123 = scmp.eq.s32.totalorder %s15, 0
      %p124 = por %p122, %p123
      %p125 = scmp.ne.s32.totalorder %s117, %s119
      %p126 = scmp.eq.s32.totalorder %s20, 3
      %p127 = por %p125, %p126
      %p128 = scmp.ne.s32.totalorder %s119, %s120
      %p129 = scmp.eq.s32.totalorder %s20, 0
      %p130 = por %p128, %p129
      %p131 = scmp.ne.s32.totalorder %s119, %s120
      %p132 = scmp.eq.s32.totalorder %s21, 3
      %p133 = por %p131, %p132
      %p135 = scmp.ne.s32.totalorder %s120, %s134
      %p136 = scmp.eq.s32.totalorder %s21, 0
      %p137 = por %p135, %p136
      %s139 = sadd.s32 %s138, 1
      %p142 = scmp.eq.s32.totalorder %s15, 3
      %p143 = scmp.ne.s32.totalorder %s138, %s140
      %p144 = scmp.eq.s32.totalorder %s15, 0
      %p145 = por %p143, %p144
      %p146 = scmp.ne.s32.totalorder %s138, %s140
      %p147 = scmp.eq.s32.totalorder %s20, 3
      %p148 = por %p146, %p147
      %p149 = scmp.ne.s32.totalorder %s140, %s141
      %p150 = scmp.eq.s32.totalorder %s20, 0
      %p151 = por %p149, %p150
      %p152 = scmp.ne.s32.totalorder %s140, %s141
      %p153 = scmp.eq.s32.totalorder %s21, 3
      %p154 = por %p152, %p153
      %p156 = scmp.ne.s32.totalorder %s141, %s155
      %p157 = scmp.eq.s32.totalorder %s21, 0
      %p158 = por %p156, %p157
      %s159 = ssub.s32 %s15, %s22
      %p160 = scmp.eq.s32.totalorder %s159, 0
      %s162 = sadd.s32 %s161, 1
      %s163 = scalar_select %p160, %s161, %s162
      %p166 = pneg %p160
      %p167 = scmp.eq.s32.totalorder %s15, 3
      %p168 = por %p166, %p167
      %p169 = scmp.ne.s32.totalorder %s161, %s164
      %p170 = scmp.eq.s32.totalorder %s15, 0
      %p171 = por %p169, %p170
      %p172 = scmp.ne.s32.totalorder %s161, %s164
      %p173 = scmp.eq.s32.totalorder %s20, 3
      %p174 = por %p172, %p173
      %p175 = scmp.ne.s32.totalorder %s164, %s165
      %p176 = scmp.eq.s32.totalorder %s20, 0
      %p177 = por %p175, %p176
      %p178 = scmp.ne.s32.totalorder %s164, %s165
      %p179 = scmp.eq.s32.totalorder %s21, 3
      %p180 = por %p178, %p179
      %p182 = scmp.ne.s32.totalorder %s165, %s181
      %p183 = scmp.eq.s32.totalorder %s21, 0
      %p184 = por %p182, %p183
      %p185 = scmp.le.s32.totalorder 1, %s15
      %p186 = scmp.lt.s32.totalorder %s15, 5
      %p187 = pnand %p185, %p186
      %p188 = pneg %p187
      // Predicated region
      $region9: #{mpt_forward.1} parent=5 // pred_check
        _
      $region10: #{mpt_forward.1} parent=5 // pred_check_branch
        %190 = sbr.rel (%p187) target = $region12
      $region11: #{mpt_forward.1} parent=5 // pred_region
        %s191 = ssub.s32 %s15, 1
        // Predicated region
        $region13: #{mpt_forward.1} parent=11 // pred_check
          %p192 = pneg %p88
        $region14: #{mpt_forward.1} parent=11 // pred_check_branch
          %194 = sbr.rel (%p192) target = $region16
        $region15: #{mpt_forward.1} parent=11 // pred_region
          _
        $region16: #{mpt_forward.1} parent=11 // pred_fallthru
          _
        // Predicated region
        $region17: #{mpt_forward.1} parent=11 // pred_check
          %p195 = pneg %p109
        $region18: #{mpt_forward.1} parent=11 // pred_check_branch
          %197 = sbr.rel (%p195) target = $region20
        $region19: #{mpt_forward.1} parent=11 // pred_region
          _
        $region20: #{mpt_forward.1} parent=11 // pred_fallthru
          _
        // Predicated region
        $region21: #{mpt_forward.1} parent=11 // pred_check
          %p198 = pneg %p130
        $region22: #{mpt_forward.1} parent=11 // pred_check_branch
          %200 = sbr.rel (%p198) target = $region24
        $region23: #{mpt_forward.1} parent=11 // pred_region
          _
        $region24: #{mpt_forward.1} parent=11 // pred_fallthru
          _
        // Predicated region
        $region25: #{mpt_forward.1} parent=11 // pred_check
          %p201 = pneg %p151
        $region26: #{mpt_forward.1} parent=11 // pred_check_branch
          %203 = sbr.rel (%p201) target = $region28
        $region27: #{mpt_forward.1} parent=11 // pred_region
          _
        $region28: #{mpt_forward.1} parent=11 // pred_fallthru
          _
      $region12: #{mpt_forward.1} parent=5 // pred_fallthru
        _
      %p204 = scmp.lt.s32.totalorder %s15, 4
      // Predicated region
      $region29: #{mpt_forward.1} parent=5 // pred_check
        %p205 = pneg %p204
      $region30: #{mpt_forward.1} parent=5 // pred_check_branch
        %207 = sbr.rel (%p205) target = $region32
      $region31: #{mpt_forward.1} parent=5 // pred_region
        // Predicated region
        $region33: #{mpt_forward.1} parent=31 // pred_check
          %p208 = pneg %p35
        $region34: #{mpt_forward.1} parent=31 // pred_check_branch
          %210 = sbr.rel (%p208) target = $region36
        $region35: #{mpt_forward.1} parent=31 // pred_region
          %s211 = sand.u32 %s25, 1
          %s212 = sand.u32 %s25, 1
          %s213 = smul.addr %s212, 32
          %s214 = scalar_lea.vmem [#allocation2], %s213
          %s215 = smul.u32 4, %s15
          %s216 = smul.addr %s215, 2
          %s217 = smul.addr %s216, 8
          %s218 = scalar_lea.vmem %s0, %s217
          // Predicated region
          $region37: #{mpt_forward.1} parent=35 // pred_check
            _
          $region38: #{mpt_forward.1} parent=35 // pred_check_branch
            %220 = sbr.rel (0) target = $region40
          $region39: #{mpt_forward.1} parent=35 // pred_region
            // Predicated region
            $region41: #{mpt_forward.1} parent=39 // pred_check
              _
            $region42: #{mpt_forward.1} parent=39 // pred_check_branch
              %222 = sbr.rel (0) target = $region44
            $region43: #{mpt_forward.1} parent=39 // pred_region
              // Predicated region
              $region56: #{mpt_forward.1} parent=43 // pred_check
                _
              $region57: #{mpt_forward.1} parent=43 // pred_check_branch
                %243 = sbr.rel (0) target = $region59
              $region58: #{mpt_forward.1} parent=43 // pred_region
                loop: start=0, step=1, limit=1
                $region60: #{mpt_forward.1} parent=58 // loop_pre_header
                  _
                $region61: #{mpt_forward.1} parent=58 // loop_header
                  %s245 = sphi 0, %s249
                  %p246 = scmp.ge.s32.totalorder %s245, 1
                  %s250 = sphi %s218, %s218
                  %s251 = sphi %s214, %s214
                $region62: #{mpt_forward.1} parent=58 // loop_header_branch
                  %248 = sbr.rel (%p246) target = $region66
                $region63: #{mpt_forward.1} parent=58 // loop_body
                  %v252 = vld [vmem:[%s250] sm:$0xff]
                  %253 = vst [vmem:[%s251] sm:$0xff] %v252
                  %v254 = vld [vmem:[%s250 + $0x10] sm:$0xff]
                  %255 = vst [vmem:[%s251 + $0x8] sm:$0xff] %v254
                  %v256 = vld [vmem:[%s250 + $0x20] sm:$0xff]
                  %257 = vst [vmem:[%s251 + $0x10] sm:$0xff] %v256
                  %v258 = vld [vmem:[%s250 + $0x30] sm:$0xff]
                  %259 = vst [vmem:[%s251 + $0x18] sm:$0xff] %v258
                $region64: #{mpt_forward.1} parent=58 // loop_footer
                  %s249 = sadd.s32 1, %s245
                $region65: #{mpt_forward.1} parent=58 // loop_footer_branch
                  %244 = sbr.rel target = $region61
                $region66: #{mpt_forward.1} parent=58 // loop_exit
                  _
              $region59: #{mpt_forward.1} parent=43 // pred_fallthru
                _
              // Predicated region
              $region67: #{mpt_forward.1} parent=43 // pred_check
                _
              $region68: #{mpt_forward.1} parent=43 // pred_check_branch
                %261 = sbr.rel target = $region70
              $region69: #{mpt_forward.1} parent=43 // pred_region
                _
              $region70: #{mpt_forward.1} parent=43 // pred_fallthru
                _
            $region44: #{mpt_forward.1} parent=39 // pred_fallthru
              _
            // Predicated region
            $region45: #{mpt_forward.1} parent=39 // pred_check
              _
            $region46: #{mpt_forward.1} parent=39 // pred_check_branch
              %224 = sbr.rel target = $region48
            $region47: #{mpt_forward.1} parent=39 // pred_region
              loop: start=0, step=1, limit=1
              $region49: #{mpt_forward.1} parent=47 // loop_pre_header
                _
              $region50: #{mpt_forward.1} parent=47 // loop_header
                %s227 = sphi 0, %s231
                %p228 = scmp.ge.s32.totalorder %s227, 1
                %s232 = sphi %s218, %s218
                %s233 = sphi %s214, %s214
              $region51: #{mpt_forward.1} parent=47 // loop_header_branch
                %230 = sbr.rel (%p228) target = $region55
              $region52: #{mpt_forward.1} parent=47 // loop_body
                %v234 = vld [vmem:[%s232] sm:$0xff]
                %235 = vst [vmem:[%s233] sm:$0xff] %v234
                %v236 = vld [vmem:[%s232 + $0x10] sm:$0xff]
                %237 = vst [vmem:[%s233 + $0x8] sm:$0xff] %v236
                %v238 = vld [vmem:[%s232 + $0x20] sm:$0xff]
                %239 = vst [vmem:[%s233 + $0x10] sm:$0xff] %v238
                %v240 = vld [vmem:[%s232 + $0x30] sm:$0xff]
                %241 = vst [vmem:[%s233 + $0x18] sm:$0xff] %v240
              $region53: #{mpt_forward.1} parent=47 // loop_footer
                %s231 = sadd.s32 1, %s227
              $region54: #{mpt_forward.1} parent=47 // loop_footer_branch
                %226 = sbr.rel target = $region50
              $region55: #{mpt_forward.1} parent=47 // loop_exit
                _
            $region48: #{mpt_forward.1} parent=39 // pred_fallthru
              _
          $region40: #{mpt_forward.1} parent=35 // pred_fallthru
            _
          %262 = vnop
        $region36: #{mpt_forward.1} parent=31 // pred_fallthru
          _
        // Predicated region
        $region71: #{mpt_forward.1} parent=31 // pred_check
          %p263 = pneg %p61
        $region72: #{mpt_forward.1} parent=31 // pred_check_branch
          %265 = sbr.rel (%p263) target = $region74
        $region73: #{mpt_forward.1} parent=31 // pred_region
          %s266 = sand.u32 %s51, 1
          %s267 = sand.u32 %s51, 1
          %s268 = smul.addr %s267, 32
          %s269 = scalar_lea.vmem [#allocation3], %s268
          %s270 = smul.u32 4, %s15
          %s271 = smul.addr %s270, 2
          %s272 = sadd.s32 1, %s271
          %s273 = smul.addr %s272, 8
          %s274 = scalar_lea.vmem %s1, %s273
          // Predicated region
          $region75: #{mpt_forward.1} parent=73 // pred_check
            _
          $region76: #{mpt_forward.1} parent=73 // pred_check_branch
            %276 = sbr.rel (0) target = $region78
          $region77: #{mpt_forward.1} parent=73 // pred_region
            // Predicated region
            $region79: #{mpt_forward.1} parent=77 // pred_check
              _
            $region80: #{mpt_forward.1} parent=77 // pred_check_branch
              %278 = sbr.rel (0) target = $region82
            $region81: #{mpt_forward.1} parent=77 // pred_region
              // Predicated region
              $region94: #{mpt_forward.1} parent=81 // pred_check
                _
              $region95: #{mpt_forward.1} parent=81 // pred_check_branch
                %299 = sbr.rel (0) target = $region97
              $region96: #{mpt_forward.1} parent=81 // pred_region
                loop: start=0, step=1, limit=1
                $region98: #{mpt_forward.1} parent=96 // loop_pre_header
                  _
                $region99: #{mpt_forward.1} parent=96 // loop_header
                  %s301 = sphi 0, %s305
                  %p302 = scmp.ge.s32.totalorder %s301, 1
                  %s306 = sphi %s274, %s274
                  %s307 = sphi %s269, %s269
                $region100: #{mpt_forward.1} parent=96 // loop_header_branch
                  %304 = sbr.rel (%p302) target = $region104
                $region101: #{mpt_forward.1} parent=96 // loop_body
                  %v308 = vld [vmem:[%s306] sm:$0xff]
                  %309 = vst [vmem:[%s307] sm:$0xff] %v308
                  %v310 = vld [vmem:[%s306 + $0x10] sm:$0xff]
                  %311 = vst [vmem:[%s307 + $0x8] sm:$0xff] %v310
                  %v312 = vld [vmem:[%s306 + $0x20] sm:$0xff]
                  %313 = vst [vmem:[%s307 + $0x10] sm:$0xff] %v312
                  %v314 = vld [vmem:[%s306 + $0x30] sm:$0xff]
                  %315 = vst [vmem:[%s307 + $0x18] sm:$0xff] %v314
                $region102: #{mpt_forward.1} parent=96 // loop_footer
                  %s305 = sadd.s32 1, %s301
                $region103: #{mpt_forward.1} parent=96 // loop_footer_branch
                  %300 = sbr.rel target = $region99
                $region104: #{mpt_forward.1} parent=96 // loop_exit
                  _
              $region97: #{mpt_forward.1} parent=81 // pred_fallthru
                _
              // Predicated region
              $region105: #{mpt_forward.1} parent=81 // pred_check
                _
              $region106: #{mpt_forward.1} parent=81 // pred_check_branch
                %317 = sbr.rel target = $region108
              $region107: #{mpt_forward.1} parent=81 // pred_region
                _
              $region108: #{mpt_forward.1} parent=81 // pred_fallthru
                _
            $region82: #{mpt_forward.1} parent=77 // pred_fallthru
              _
            // Predicated region
            $region83: #{mpt_forward.1} parent=77 // pred_check
              _
            $region84: #{mpt_forward.1} parent=77 // pred_check_branch
              %280 = sbr.rel target = $region86
            $region85: #{mpt_forward.1} parent=77 // pred_region
              loop: start=0, step=1, limit=1
              $region87: #{mpt_forward.1} parent=85 // loop_pre_header
                _
              $region88: #{mpt_forward.1} parent=85 // loop_header
                %s283 = sphi 0, %s287
                %p284 = scmp.ge.s32.totalorder %s283, 1
                %s288 = sphi %s274, %s274
                %s289 = sphi %s269, %s269
              $region89: #{mpt_forward.1} parent=85 // loop_header_branch
                %286 = sbr.rel (%p284) target = $region93
              $region90: #{mpt_forward.1} parent=85 // loop_body
                %v290 = vld [vmem:[%s288] sm:$0xff]
                %291 = vst [vmem:[%s289] sm:$0xff] %v290
                %v292 = vld [vmem:[%s288 + $0x10] sm:$0xff]
                %293 = vst [vmem:[%s289 + $0x8] sm:$0xff] %v292
                %v294 = vld [vmem:[%s288 + $0x20] sm:$0xff]
                %295 = vst [vmem:[%s289 + $0x10] sm:$0xff] %v294
                %v296 = vld [vmem:[%s288 + $0x30] sm:$0xff]
                %297 = vst [vmem:[%s289 + $0x18] sm:$0xff] %v296
              $region91: #{mpt_forward.1} parent=85 // loop_footer
                %s287 = sadd.s32 1, %s283
              $region92: #{mpt_forward.1} parent=85 // loop_footer_branch
                %282 = sbr.rel target = $region88
              $region93: #{mpt_forward.1} parent=85 // loop_exit
                _
            $region86: #{mpt_forward.1} parent=77 // pred_fallthru
              _
          $region78: #{mpt_forward.1} parent=73 // pred_fallthru
            _
          %318 = vnop
        $region74: #{mpt_forward.1} parent=31 // pred_fallthru
          _
      $region32: #{mpt_forward.1} parent=5 // pred_fallthru
        _
      %p319 = scmp.le.s32.totalorder 1, %s15
      %p320 = scmp.lt.s32.totalorder %s15, 5
      %p321 = pnand %p319, %p320
      %p322 = pneg %p321
      // Predicated region
      $region109: #{mpt_forward.1} parent=5 // pred_check
        _
      $region110: #{mpt_forward.1} parent=5 // pred_check_branch
        %324 = sbr.rel (%p321) target = $region112
      $region111: #{mpt_forward.1} parent=5 // pred_region
        %s325 = ssub.s32 %s15, 1
        %s326 = sand.u32 %s28, 1
        %s327 = sand.u32 %s28, 1
        %s328 = smul.addr %s327, 32
        %s329 = scalar_lea.vmem [#allocation2], %s328
        // Predicated region
        $region113: #{mpt_forward.1} parent=111 // pred_check
          %p330 = pneg %p41
        $region114: #{mpt_forward.1} parent=111 // pred_check_branch
          %332 = sbr.rel (%p330) target = $region116
        $region115: #{mpt_forward.1} parent=111 // pred_region
          _
        $region116: #{mpt_forward.1} parent=111 // pred_fallthru
          _
        %s333 = sand.u32 %s54, 1
        %s334 = sand.u32 %s54, 1
        %s335 = smul.addr %s334, 32
        %s336 = scalar_lea.vmem [#allocation3], %s335
        // Predicated region
        $region117: #{mpt_forward.1} parent=111 // pred_check
          %p337 = pneg %p67
        $region118: #{mpt_forward.1} parent=111 // pred_check_branch
          %339 = sbr.rel (%p337) target = $region120
        $region119: #{mpt_forward.1} parent=111 // pred_region
          _
        $region120: #{mpt_forward.1} parent=111 // pred_fallthru
          _
        %s340 = sand.u32 %s28, 1
        %s341 = sand.u32 %s28, 1
        %s342 = smul.addr %s341, 32
        %s343 = scalar_lea.vmem [#allocation2], %s342
        %p344 = pneg %p41
        %p345 = pneg %p38
        %s346 = sand.u32 %s54, 1
        %s347 = sand.u32 %s54, 1
        %s348 = smul.addr %s347, 32
        %s349 = scalar_lea.vmem [#allocation3], %s348
        %p350 = pneg %p67
        %p351 = pneg %p64
        %p352 = pneg %p88
        %p353 = pneg %p85
        %p354 = pneg %p109
        %p355 = pneg %p106
        %p356 = pneg %p130
        %p357 = pneg %p127
        %p358 = pneg %p151
        %p359 = pneg %p148
        %p360 = pneg %p177
        %p361 = pneg %p174
        %s362 = sand.u32 %s164, 1
        %s363 = scalar_lea.sflag [#allocation5], %s362
        %s364 = sand.u32 %s164, 1
        %s365 = smul.addr %s364, 32
        %s366 = scalar_lea.vmem [#allocation4], %s365
        %s367 = smul.u32 4, %s20
        %s368 = smul.u32 4, %s20
        %s369 = smul.u32 4, %s20
        %v370 = vld [vmem:[%s329] sm:$0xff]
        %v371 = vld [vmem:[%s329 + $0x8] sm:$0xff]
        %v372 = vld [vmem:[%s329 + $0x10] sm:$0xff]
        %v373 = vld [vmem:[%s329 + $0x18] sm:$0xff]
        %v374 = vld [vmem:[%s336] sm:$0xff]
        %v375 = vld [vmem:[%s336 + $0x8] sm:$0xff]
        %v376 = vld [vmem:[%s336 + $0x10] sm:$0xff]
        %v377 = vld [vmem:[%s336 + $0x18] sm:$0xff]
        %v378 = vld [vmem:[%s2] sm:$0xff]
        %v379 = vld [vmem:[%s2 + $0x8] sm:$0xff]
        %v380 = vld [vmem:[%s2 + $0x10] sm:$0xff]
        %v381 = vld [vmem:[%s2 + $0x18] sm:$0xff]
        %v382 = vld [vmem:[%s2 + $0x20] sm:$0xff]
        %v383 = vld [vmem:[%s2 + $0x28] sm:$0xff]
        %v384 = vld [vmem:[%s2 + $0x30] sm:$0xff]
        %v385 = vld [vmem:[%s2 + $0x38] sm:$0xff]
        %v386 = vld [vmem:[%s2 + $0x40] sm:$0xff]
        %v387 = vld [vmem:[%s2 + $0x48] sm:$0xff]
        %v388 = vld [vmem:[%s2 + $0x50] sm:$0xff]
        %v389 = vld [vmem:[%s2 + $0x58] sm:$0xff]
        %v390 = vld [vmem:[%s2 + $0x60] sm:$0xff]
        %v391 = vld [vmem:[%s2 + $0x68] sm:$0xff]
        %v392 = vld [vmem:[%s2 + $0x70] sm:$0xff]
        %v393 = vld [vmem:[%s2 + $0x78] sm:$0xff]
        %v394 = vld [vmem:[%s3] sm:$0xff]
        %v395 = vld [vmem:[%s3 + $0x8] sm:$0xff]
        %v396 = vld [vmem:[%s3 + $0x10] sm:$0xff]
        %v397 = vld [vmem:[%s3 + $0x18] sm:$0xff]
        %v398 = vld [vmem:[%s3 + $0x20] sm:$0xff]
        %v399 = vld [vmem:[%s3 + $0x28] sm:$0xff]
        %v400 = vld [vmem:[%s3 + $0x30] sm:$0xff]
        %v401 = vld [vmem:[%s3 + $0x38] sm:$0xff]
        %v402 = vld [vmem:[%s3 + $0x40] sm:$0xff]
        %v403 = vld [vmem:[%s3 + $0x48] sm:$0xff]
        %v404 = vld [vmem:[%s3 + $0x50] sm:$0xff]
        %v405 = vld [vmem:[%s3 + $0x58] sm:$0xff]
        %v406 = vld [vmem:[%s3 + $0x60] sm:$0xff]
        %v407 = vld [vmem:[%s3 + $0x68] sm:$0xff]
        %v408 = vld [vmem:[%s3 + $0x70] sm:$0xff]
        %v409 = vld [vmem:[%s3 + $0x78] sm:$0xff]
        %410 = vmatprep.subr.mxu0 0.0
        %411 = vmatpush1.msra.mxu0 %v394
        %412 = vmatprep.subr.mxu0 0.0
        %413 = vmatpush1.msra.mxu0 %v395
        %414 = vmatprep.subr.mxu0 0.0
        %415 = vmatpush1.msra.mxu0 %v396
        %416 = vmatprep.subr.mxu0 0.0
        %417 = vmatpush1.msra.mxu0 %v397
        %418 = vmatprep.subr.mxu0 0.0
        %419 = vmatpush1.msra.mxu0 %v398
        %420 = vmatprep.subr.mxu0 0.0
        %421 = vmatpush1.msra.mxu0 %v399
        %422 = vmatprep.subr.mxu0 0.0
        %423 = vmatpush1.msra.mxu0 %v400
        %424 = vmatprep.subr.mxu0 0.0
        %425 = vmatpush1.msra.mxu0 %v401
        %426 = vmatprep.subr.mxu0 0.0
        %427 = vmatpush1.msra.mxu0 %v402
        %428 = vmatprep.subr.mxu0 0.0
        %429 = vmatpush1.msra.mxu0 %v403
        %430 = vmatprep.subr.mxu0 0.0
        %431 = vmatpush1.msra.mxu0 %v404
        %432 = vmatprep.subr.mxu0 0.0
        %433 = vmatpush1.msra.mxu0 %v405
        %434 = vmatprep.subr.mxu0 0.0
        %435 = vmatpush1.msra.mxu0 %v406
        %436 = vmatprep.subr.mxu0 0.0
        %437 = vmatpush1.msra.mxu0 %v407
        %438 = vmatprep.subr.mxu0 0.0
        %439 = vmatpush1.msra.mxu0 %v408
        %440 = vmatprep.subr.mxu0 0.0
        %441 = vmatpush1.msra.mxu0 %v409
        %442 = vmatprep.subr.mxu0 0.0
        %443 = vmatpush1.msra.mxu0 0.0
        %444 = vmatprep.subr.mxu0 0.0
        %445 = vmatpush1.msra.mxu0 0.0
        %446 = vmatprep.subr.mxu0 0.0
        %447 = vmatpush1.msra.mxu0 0.0
        %448 = vmatprep.subr.mxu0 0.0
        %449 = vmatpush1.msra.mxu0 0.0
        %450 = vmatprep.subr.mxu0 0.0
        %451 = vmatpush1.msra.mxu0 0.0
        %452 = vmatprep.subr.mxu0 0.0
        %453 = vmatpush1.msra.mxu0 0.0
        %454 = vmatprep.subr.mxu0 0.0
        %455 = vmatpush1.msra.mxu0 0.0
        %456 = vmatprep.subr.mxu0 0.0
        %457 = vmatpush1.msra.mxu0 0.0
        %458 = vmatprep.subr.mxu0 0.0
        %459 = vmatpush1.msra.mxu0 0.0
        %460 = vmatprep.subr.mxu0 0.0
        %461 = vmatpush1.msra.mxu0 0.0
        %462 = vmatprep.subr.mxu0 0.0
        %463 = vmatpush1.msra.mxu0 0.0
        %464 = vmatprep.subr.mxu0 0.0
        %465 = vmatpush1.msra.mxu0 0.0
        %466 = vmatprep.subr.mxu0 0.0
        %467 = vmatpush1.msra.mxu0 0.0
        %468 = vmatprep.subr.mxu0 0.0
        %469 = vmatpush1.msra.mxu0 0.0
        %470 = vmatprep.subr.mxu0 0.0
        %471 = vmatpush1.msra.mxu0 0.0
        %472 = vmatprep.subr.mxu0 0.0
        %473 = vmatpush1.msra.mxu0 0.0
        %474 = vmatprep.mubr.f32.mxu0 0.0
        %475 = vmatmul.mubr.f32.gmra.mrb[0].mxu0 %v374
        %v476 = vpop.f32.mrb[0].mxu0
        %v477 = vadd.f32 0.0, %v476
        %v478 = vpop.f32.mrb[0].mxu0
        %479 = vmatprep.mubr.f32.mxu0 0.0
        %480 = vmatmul.mubr.f32.gmra.mrb[0].mxu0 %v375
        %v481 = vpop.f32.mrb[0].mxu0
        %v482 = vadd.f32 0.0, %v481
        %v483 = vpop.f32.mrb[0].mxu0
        %484 = vmatprep.mubr.f32.mxu0 0.0
        %485 = vmatmul.mubr.f32.gmra.mrb[0].mxu0 %v376
        %v486 = vpop.f32.mrb[0].mxu0
        %v487 = vadd.f32 0.0, %v486
        %v488 = vpop.f32.mrb[0].mxu0
        %489 = vmatprep.mubr.f32.mxu0 0.0
        %490 = vmatmul.mubr.f32.gmra.mrb[0].mxu0 %v377
        %v491 = vpop.f32.mrb[0].mxu0
        %v492 = vadd.f32 0.0, %v491
        %v493 = vpop.f32.mrb[0].mxu0
        %494 = vdwg.mxu0
        %495 = vmatprep.subr.mxu0 0.0
        %496 = vmatpush1.msra.mxu0 %v378
        %497 = vmatprep.subr.mxu0 0.0
        %498 = vmatpush1.msra.mxu0 %v379
        %499 = vmatprep.subr.mxu0 0.0
        %500 = vmatpush1.msra.mxu0 %v380
        %501 = vmatprep.subr.mxu0 0.0
        %502 = vmatpush1.msra.mxu0 %v381
        %503 = vmatprep.subr.mxu0 0.0
        %504 = vmatpush1.msra.mxu0 %v382
        %505 = vmatprep.subr.mxu0 0.0
        %506 = vmatpush1.msra.mxu0 %v383
        %507 = vmatprep.subr.mxu0 0.0
        %508 = vmatpush1.msra.mxu0 %v384
        %509 = vmatprep.subr.mxu0 0.0
        %510 = vmatpush1.msra.mxu0 %v385
        %511 = vmatprep.subr.mxu0 0.0
        %512 = vmatpush1.msra.mxu0 %v386
        %513 = vmatprep.subr.mxu0 0.0
        %514 = vmatpush1.msra.mxu0 %v387
        %515 = vmatprep.subr.mxu0 0.0
        %516 = vmatpush1.msra.mxu0 %v388
        %517 = vmatprep.subr.mxu0 0.0
        %518 = vmatpush1.msra.mxu0 %v389
        %519 = vmatprep.subr.mxu0 0.0
        %520 = vmatpush1.msra.mxu0 %v390
        %521 = vmatprep.subr.mxu0 0.0
        %522 = vmatpush1.msra.mxu0 %v391
        %523 = vmatprep.subr.mxu0 0.0
        %524 = vmatpush1.msra.mxu0 %v392
        %525 = vmatprep.subr.mxu0 0.0
        %526 = vmatpush1.msra.mxu0 %v393
        %527 = vmatprep.subr.mxu0 0.0
        %528 = vmatpush1.msra.mxu0 0.0
        %529 = vmatprep.subr.mxu0 0.0
        %530 = vmatpush1.msra.mxu0 0.0
        %531 = vmatprep.subr.mxu0 0.0
        %532 = vmatpush1.msra.mxu0 0.0
        %533 = vmatprep.subr.mxu0 0.0
        %534 = vmatpush1.msra.mxu0 0.0
        %535 = vmatprep.subr.mxu0 0.0
        %536 = vmatpush1.msra.mxu0 0.0
        %537 = vmatprep.subr.mxu0 0.0
        %538 = vmatpush1.msra.mxu0 0.0
        %539 = vmatprep.subr.mxu0 0.0
        %540 = vmatpush1.msra.mxu0 0.0
        %541 = vmatprep.subr.mxu0 0.0
        %542 = vmatpush1.msra.mxu0 0.0
        %543 = vmatprep.subr.mxu0 0.0
        %544 = vmatpush1.msra.mxu0 0.0
        %545 = vmatprep.subr.mxu0 0.0
        %546 = vmatpush1.msra.mxu0 0.0
        %547 = vmatprep.subr.mxu0 0.0
        %548 = vmatpush1.msra.mxu0 0.0
        %549 = vmatprep.subr.mxu0 0.0
        %550 = vmatpush1.msra.mxu0 0.0
        %551 = vmatprep.subr.mxu0 0.0
        %552 = vmatpush1.msra.mxu0 0.0
        %553 = vmatprep.subr.mxu0 0.0
        %554 = vmatpush1.msra.mxu0 0.0
        %555 = vmatprep.subr.mxu0 0.0
        %556 = vmatpush1.msra.mxu0 0.0
        %557 = vmatprep.subr.mxu0 0.0
        %558 = vmatpush1.msra.mxu0 0.0
        %559 = vmatprep.mubr.f32.mxu0 0.0
        %560 = vmatmul.mubr.f32.gmra.mrb[0].mxu0 %v370
        %v561 = vpop.f32.mrb[0].mxu0
        %v562 = vadd.f32 %v477, %v561
        %v563 = vpop.f32.mrb[0].mxu0
        %564 = vmatprep.mubr.f32.mxu0 0.0
        %565 = vmatmul.mubr.f32.gmra.mrb[0].mxu0 %v371
        %v566 = vpop.f32.mrb[0].mxu0
        %v567 = vadd.f32 %v482, %v566
        %v568 = vpop.f32.mrb[0].mxu0
        %569 = vmatprep.mubr.f32.mxu0 0.0
        %570 = vmatmul.mubr.f32.gmra.mrb[0].mxu0 %v372
        %v571 = vpop.f32.mrb[0].mxu0
        %v572 = vadd.f32 %v487, %v571
        %v573 = vpop.f32.mrb[0].mxu0
        %574 = vmatprep.mubr.f32.mxu0 0.0
        %575 = vmatmul.mubr.f32.gmra.mrb[0].mxu0 %v373
        %v576 = vpop.f32.mrb[0].mxu0
        %v577 = vadd.f32 %v492, %v576
        %v578 = vpop.f32.mrb[0].mxu0
        %579 = vdwg.mxu0
        %580 = vadd.xlane.f32.xlu0 %v562
        %v581 = vpop.xlane.xlu0 %580
        %582 = vadd.xlane.f32.xlu0 %v567
        %v583 = vpop.xlane.xlu0 %582
        %584 = vadd.xlane.f32.xlu0 %v572
        %v585 = vpop.xlane.xlu0 %584
        %586 = vadd.xlane.f32.xlu0 %v577
        %v587 = vpop.xlane.xlu0 %586
        %v588 = vrcp.pop 128.0
        %v589 = vmul.f32 %v581, %v588
        %v590 = vmul.f32 %v583, %v588
        %v591 = vmul.f32 %v585, %v588
        %v592 = vmul.f32 %v587, %v588
        %v593 = vsub.f32 %v562, %v589
        %v594 = vsub.f32 %v567, %v590
        %v595 = vsub.f32 %v572, %v591
        %v596 = vsub.f32 %v577, %v592
        %v597 = vmul.f32 %v593, %v593
        %v598 = vmul.f32 %v594, %v594
        %v599 = vmul.f32 %v595, %v595
        %v600 = vmul.f32 %v596, %v596
        %601 = vadd.xlane.f32.xlu0 %v597
        %v602 = vpop.xlane.xlu0 %601
        %603 = vadd.xlane.f32.xlu0 %v598
        %v604 = vpop.xlane.xlu0 %603
        %605 = vadd.xlane.f32.xlu0 %v599
        %v606 = vpop.xlane.xlu0 %605
        %607 = vadd.xlane.f32.xlu0 %v600
        %v608 = vpop.xlane.xlu0 %607
        %v609 = vmul.f32 %v602, %v588
        %v610 = vmul.f32 %v604, %v588
        %v611 = vmul.f32 %v606, %v588
        %v612 = vmul.f32 %v608, %v588
        %v613 = vadd.f32 %v609, 1e-05
        %v614 = vadd.f32 %v610, 1e-05
        %v615 = vadd.f32 %v611, 1e-05
        %v616 = vadd.f32 %v612, 1e-05
        %v617 = vrsqrt.pop %v613
        %v618 = vrsqrt.pop %v614
        %v619 = vrsqrt.pop %v615
        %v620 = vrsqrt.pop %v616
        %v621 = vmul.f32 %v593, %v617
        %v622 = vmul.f32 %v594, %v618
        %v623 = vmul.f32 %v595, %v619
        %v624 = vmul.f32 %v596, %v620
        %v625 = vld [vmem:[%s4] sm:$0x1]
        %v627 = vlaneseq
        %v628 = vshrl.u32 %v627, 7
        %v629 = vsub.s32 0, %v628
        %v630 = vrot.slane %v625, %v629
        %v632 = vmul.f32 %v621, %v630
        %v633 = vmul.f32 %v622, %v630
        %v634 = vmul.f32 %v623, %v630
        %v635 = vmul.f32 %v624, %v630
        %v636 = vld [vmem:[%s5] sm:$0x1]
        %v638 = vlaneseq
        %v639 = vshrl.u32 %v638, 7
        %v640 = vsub.s32 0, %v639
        %v641 = vrot.slane %v636, %v640
        %v643 = vadd.f32 %v632, %v641
        %v644 = vadd.f32 %v633, %v641
        %v645 = vadd.f32 %v634, %v641
        %v646 = vadd.f32 %v635, %v641
        %647 = vst [vmem:[%s366] sm:$0xff] %v643
        %648 = vst [vmem:[%s366 + $0x8] sm:$0xff] %v644
        %649 = vst [vmem:[%s366 + $0x10] sm:$0xff] %v645
        %650 = vst [vmem:[%s366 + $0x18] sm:$0xff] %v646
        %s651 = sand.u32 %s164, 1
        %s652 = scalar_lea.sflag [#allocation5], %s651
        %s653 = sand.u32 %s164, 1
        %s654 = smul.addr %s653, 32
        %s655 = scalar_lea.vmem [#allocation4], %s654
        // Predicated region
        $region121: #{mpt_forward.1} parent=111 // pred_check
          %p656 = pneg %p174
        $region122: #{mpt_forward.1} parent=111 // pred_check_branch
          %658 = sbr.rel (%p656) target = $region124
        $region123: #{mpt_forward.1} parent=111 // pred_region
          %s659 = smul.u32 4, %s20
          %s661 = ssub.s32 512, 512
          %662 = vsyncadd %s652, %s661
          %s663 = smul.addr %s659, 128
          %s664 = scalar_lea.hbm %s6, %s663
          %s665 = sshll.u32 %s655, 4
          %s666 = int_to_ptr.vmem [resolvable:$true] %s665
          %671 = dma.vmem_to_hbm [thread:$0]  %s666, 512, %s664, %s652, 128, 128, 8
        $region124: #{mpt_forward.1} parent=111 // pred_fallthru
          _
      $region112: #{mpt_forward.1} parent=5 // pred_fallthru
        _
      %p672 = scmp.le.s32.totalorder 2, %s15
      // Predicated region
      $region125: #{mpt_forward.1} parent=5 // pred_check
        %p673 = pneg %p672
      $region126: #{mpt_forward.1} parent=5 // pred_check_branch
        %675 = sbr.rel (%p673) target = $region128
      $region127: #{mpt_forward.1} parent=5 // pred_region
        %s676 = ssub.s32 %s15, 2
        // Predicated region
        $region129: #{mpt_forward.1} parent=127 // pred_check
          %p677 = pneg %p180
        $region130: #{mpt_forward.1} parent=127 // pred_check_branch
          %679 = sbr.rel (%p677) target = $region132
        $region131: #{mpt_forward.1} parent=127 // pred_region
          %s680 = sand.u32 %s165, 1
          %s681 = scalar_lea.sflag [#allocation5], %s680
          %s682 = sand.u32 %s165, 1
          %s683 = smul.addr %s682, 32
          %s684 = scalar_lea.vmem [#allocation4], %s683
          %685 = dma.done %s681, 512
        $region132: #{mpt_forward.1} parent=127 // pred_fallthru
          _
      $region128: #{mpt_forward.1} parent=5 // pred_fallthru
        _
    $region6: #{mpt_forward.1} parent=1 // loop_footer
      %s19 = sadd.s32 1, %s15
    $region7: #{mpt_forward.1} parent=1 // loop_footer_branch
      %14 = sbr.rel target = $region3
    $region8: #{mpt_forward.1} parent=1 // loop_exit
      _
    %686 = vsyncpa [#allocation5], 1
    %s687 = scalar_lea.sflag [#allocation5], 1
    %688 = vsyncpa %s687, 1

</llo_original>
